<compile_context>
chip_gen: v6e
topology: v6e:2x2x1
jax: 0.10.0
libtpu: 0.0.40
codegen_flags: <defaults>
</compile_context>

<pallas_src>
import jax
import jax.numpy as jnp
from jax.experimental import pallas as pl
from jax.experimental.pallas import tpu as pltpu


# ---------------------------------------------------------------------------
# GaussianDiffusion schedule buffers (cosine_beta_schedule), as in the module.
# ---------------------------------------------------------------------------
def cosine_beta_schedule(timesteps, s=0.008):
    steps = timesteps + 1
    x = jnp.linspace(0.0, float(timesteps), steps, dtype=jnp.float32)
    alphas_cumprod = jnp.cos((x / timesteps + s) / (1 + s) * jnp.pi * 0.5) ** 2
    alphas_cumprod = alphas_cumprod / alphas_cumprod[0]
    betas = 1.0 - alphas_cumprod[1:] / alphas_cumprod[:-1]
    return jnp.clip(betas, 0.0, 0.9999)


def make_schedule(timesteps):
    betas = cosine_beta_schedule(timesteps)
    alphas = 1.0 - betas
    alphas_cumprod = jnp.cumprod(alphas)
    sqrt_alphas_cumprod = jnp.sqrt(alphas_cumprod).astype(jnp.float32)
    sqrt_one_minus_alphas_cumprod = jnp.sqrt(1.0 - alphas_cumprod).astype(jnp.float32)
    return sqrt_alphas_cumprod, sqrt_one_minus_alphas_cumprod


# ---------------------------------------------------------------------------
# Fused p_losses kernel: q_sample + denoise stand-in + L1 reduction.
# Per grid step (b, j) it sees one (C, S_TILE) lane-dense tile of x and noise.
# ---------------------------------------------------------------------------
def diffusion_loss_kernel(t_ref, sac_ref, s1m_ref,            # scalar prefetch (SMEM)
                          x_ref, noise_ref, wt_ref, bias_ref,  # VMEM inputs
                          out_ref,                             # VMEM output
                          acc_ref):                            # VMEM scratch
    b = pl.program_id(0)
    j = pl.program_id(1)

    @pl.when(j == 0)
    def _():
        acc_ref[...] = jnp.zeros_like(acc_ref)

    # extract(sqrt_alphas_cumprod, t) / extract(sqrt_one_minus_..., t):
    # per-batch scalar coefficients gathered straight from SMEM.
    tb = t_ref[b]
    coef_a = sac_ref[tb]
    coef_b = s1m_ref[tb]

    x = x_ref[0]          # (C, S_TILE)   lane axis = flattened F*H*W
    nz = noise_ref[0]     # (C, S_TILE)

    # q_sample
    x_noisy = coef_a * x + coef_b * nz

    # denoise_fn stand-in: Residual(Conv1x1):  x_recon = W^T x_noisy + bias + x_noisy
    # TODO(synk): the real denoise_fn is an arbitrary external 3D U-Net passed to
    # the constructor; it has no fixed Pallas equivalent, so a deterministic
    # Residual(1x1 conv) channel mix is used as its payload here.
    # Full-(C, S_TILE) broadcast FMAs on the VPU (C is tiny, MXU not needed;
    # no per-row slices, no concatenate -> full sublane utilization).
    wt = wt_ref[...]                              # (C, C) = w.T  (wt[d, c] = w[c, d])
    x_recon = x_noisy + bias_ref[...]             # (C, S_TILE) + (C, 1) residual + bias
    C = x.shape[0]
    for c in range(C):                            # static unroll over tiny C
        x_recon = x_recon + wt[:, c:c + 1] * x_noisy[c:c + 1, :]

    # L1 partial sum for this tile, accumulated across the j axis in scratch.
    acc_ref[...] += jnp.sum(jnp.abs(nz - x_recon))

    @pl.when(j == pl.num_programs(1) - 1)
    def _():
        out_ref[...] = acc_ref[...].reshape(1, 8, 128)


def _pick_s_tile(S, C, itemsize=4, target_tile_bytes=2 << 20, vmem_budget_bytes=12 << 20):
    """Largest multiple-of-128 divisor of S sized for ~target_tile_bytes per input.

    Guards against degenerate divisors (e.g. S = 128 * prime): if the
    bandwidth-target pick is pathologically small, take the largest divisor
    tile whose double-buffered (2 inputs x 2 buffers) footprint fits VMEM.
    """
    assert S % 128 == 0
    base = S // 128
    divisors = [128 * d for d in range(1, base + 1) if base % d == 0]
    target_elems = max(128, target_tile_bytes // (C * itemsize))
    budget_elems = max(128, vmem_budget_bytes // (4 * C * itemsize))
    candidates = [t for t in divisors if t <= target_elems]
    tile = max(candidates) if candidates else 128
    if tile * 4 < min(target_elems, S):
        fitting = [t for t in divisors if t <= budget_elems]
        if fitting:
            tile = max(tile, max(fitting))
    return tile


def gaussian_diffusion_forward(x, noise, t, sqrt_ac, sqrt_1m_ac, w, bias):
    """Fused GaussianDiffusion.forward (l1 loss). x, noise: (B, C, F, H, W)."""
    B, C, F, H, W = x.shape
    S = F * H * W
    assert S % 128 == 0, "flattened spatial dim must be a multiple of 128"
    # TODO(synk): ragged spatial tails (S % 128 != 0) are not handled.
    s_tile = _pick_s_tile(S, C)
    n_j = S // s_tile

    # Free reshape (no transpose, no extra HBM pass): lane axis = spatial.
    x3 = x.reshape(B, C, S)
    n3 = noise.reshape(B, C, S)

    # Tiny resident VMEM operands for the denoise stand-in.
    w_t = jnp.transpose(w).astype(jnp.float32)          # (C_out, C_in)
    bias2d = bias.reshape(C, 1).astype(jnp.float32)     # (C, 1)

    partials = pl.pallas_call(
        diffusion_loss_kernel,
        out_shape=jax.ShapeDtypeStruct((B, 8, 128), jnp.float32),
        grid_spec=pltpu.PrefetchScalarGridSpec(
            # t, sqrt_alphas_cumprod, sqrt_one_minus_alphas_cumprod -> SMEM
            num_scalar_prefetch=3,
            grid=(B, n_j),
            in_specs=[
                pl.BlockSpec((1, C, s_tile),
                             lambda b, j, t, sa, s1: (b, 0, j)),   # x
                pl.BlockSpec((1, C, s_tile),
                             lambda b, j, t, sa, s1: (b, 0, j)),   # noise
                pl.BlockSpec((C, C),
                             lambda b, j, t, sa, s1: (0, 0)),      # w.T (resident)
                pl.BlockSpec((C, 1),
                             lambda b, j, t, sa, s1: (0, 0)),      # bias (resident)
            ],
            out_specs=pl.BlockSpec((1, 8, 128),
                                   lambda b, j, t, sa, s1: (b, 0, 0)),
            scratch_shapes=[pltpu.VMEM((8, 128), jnp.float32)],
        ),
        compiler_params=pltpu.CompilerParams(
            dimension_semantics=("parallel", "arbitrary"),
            vmem_limit_bytes=48 * 1024 * 1024,
        ),
    )(t, sqrt_ac, sqrt_1m_ac, x3, n3, w_t, bias2d)

    return jnp.sum(partials[:, 0, 0]) / x.size


if __name__ == "__main__":
    key = jax.random.PRNGKey(0)
    kx, kn, kt, kw, kb = jax.random.split(key, 5)

    B, C, F, H, W = 2, 4, 2, 16, 16
    timesteps = 1000

    x = jax.random.normal(kx, (B, C, F, H, W), dtype=jnp.float32)
    noise = jax.random.normal(kn, (B, C, F, H, W), dtype=jnp.float32)
    t = jax.random.randint(kt, (B,), 0, timesteps, dtype=jnp.int32)

    # deterministic parameters for the denoise_fn stand-in (1x1 conv: C -> C)
    w = jax.random.normal(kw, (C, C), dtype=jnp.float32) * 0.1
    bias = jax.random.normal(kb, (C,), dtype=jnp.float32) * 0.1

    sqrt_ac, sqrt_1m_ac = make_schedule(timesteps)

    loss = gaussian_diffusion_forward(x, noise, t, sqrt_ac, sqrt_1m_ac, w, bias)
    loss = jax.block_until_ready(loss)

    # Pure-JAX reference of the same forward pass.
    a = sqrt_ac[t].reshape(B, 1, 1, 1, 1)
    bm = sqrt_1m_ac[t].reshape(B, 1, 1, 1, 1)
    x_noisy = a * x + bm * noise
    x_recon = (jnp.einsum("bcfhw,cd->bdfhw", x_noisy, w,
                          precision=jax.lax.Precision.HIGHEST)
               + bias.reshape(1, C, 1, 1, 1) + x_noisy)
    ref_loss = jnp.mean(jnp.abs(noise - x_recon))

    assert loss.shape == ()
    assert jnp.allclose(loss, ref_loss, atol=1e-4, rtol=1e-5), (loss, ref_loss)

    print("KERNEL_OK")
</pallas_src>

<mosaic_0001>
module attributes {stable_mosaic.version = 11 : i64} {
  func.func @diffusion_loss_kernel(%arg0: i32, %arg1: i32, %arg2: memref<2xi32, #tpu.memory_space<smem>>, %arg3: memref<1000xf32, #tpu.memory_space<smem>>, %arg4: memref<1000xf32, #tpu.memory_space<smem>>, %arg5: memref<1x4x512xf32, #tpu.memory_space<vmem>>, %arg6: memref<1x4x512xf32, #tpu.memory_space<vmem>>, %arg7: memref<4x4xf32, #tpu.memory_space<vmem>>, %arg8: memref<4x1xf32, #tpu.memory_space<vmem>>, %arg9: memref<1x8x128xf32, #tpu.memory_space<vmem>>, %arg10: memref<8x128xf32, #tpu.memory_space<vmem>>) attributes {dimension_semantics = [#tpu.dimension_semantics<parallel>, #tpu.dimension_semantics<arbitrary>], iteration_bounds = array<i64: 2, 1>, scalar_prefetch = 3 : i64, scratch_operands = 1 : i64, tpu.core_type = #tpu.core_type<tc>, window_params = [{transform_indices = @transform_0, window_bounds = array<i64: 1, 4, 512>}, {transform_indices = @transform_1, window_bounds = array<i64: 1, 4, 512>}, {pipeline_mode = #tpu.pipeline_mode<synchronous>, transform_indices = @transform_2, window_bounds = array<i64: 4, 4>}, {pipeline_mode = #tpu.pipeline_mode<synchronous>, transform_indices = @transform_3, window_bounds = array<i64: 4, 1>}, {transform_indices = @transform_4, window_bounds = array<i64: 1, 8, 128>}]} {
    %c0_i32 = arith.constant 0 : i32
    %0 = arith.cmpi eq, %arg1, %c0_i32 : i32
    %1 = arith.extui %0 : i1 to i32
    %c0_i32_0 = arith.constant 0 : i32
    %2 = arith.cmpi ne, %1, %c0_i32_0 : i32
    scf.if %2 {
      %cst_16 = arith.constant 0.000000e+00 : f32
      %59 = vector.broadcast %cst_16 : f32 to vector<8x128xf32>
      %c0_17 = arith.constant 0 : index
      %c0_18 = arith.constant 0 : index
      %60 = vector.load %arg10[%c0_17, %c0_18] : memref<8x128xf32, #tpu.memory_space<vmem>>, vector<8x128xf32>
      tpu.vector_store %arg10[%c0_17, %c0_18], %59 {strides = array<i32>} : memref<8x128xf32, #tpu.memory_space<vmem>>, vector<8x128xf32>,
    } else {
    }
    %3 = arith.index_cast %arg0 : i32 to index
    %4 = memref.load %arg2[%3] : memref<2xi32, #tpu.memory_space<smem>>
    %5 = arith.index_cast %4 : i32 to index
    %6 = memref.load %arg3[%5] : memref<1000xf32, #tpu.memory_space<smem>>
    %7 = arith.index_cast %4 : i32 to index
    %8 = memref.load %arg4[%7] : memref<1000xf32, #tpu.memory_space<smem>>
    %c0 = arith.constant 0 : index
    %c0_1 = arith.constant 0 : index
    %c0_2 = arith.constant 0 : index
    %9 = vector.load %arg5[%c0, %c0_1, %c0_2] : memref<1x4x512xf32, #tpu.memory_space<vmem>>, vector<1x4x512xf32>
    %10 = vector.shape_cast %9 : vector<1x4x512xf32> to vector<4x512xf32>
    %c0_3 = arith.constant 0 : index
    %c0_4 = arith.constant 0 : index
    %c0_5 = arith.constant 0 : index
    %11 = vector.load %arg6[%c0_3, %c0_4, %c0_5] : memref<1x4x512xf32, #tpu.memory_space<vmem>>, vector<1x4x512xf32>
    %12 = vector.shape_cast %11 : vector<1x4x512xf32> to vector<4x512xf32>
    %13 = vector.broadcast %6 : f32 to vector<4x512xf32>
    %14 = arith.mulf %13, %10 : vector<4x512xf32>
    %15 = vector.broadcast %8 : f32 to vector<4x512xf32>
    %16 = arith.mulf %15, %12 : vector<4x512xf32>
    %17 = arith.addf %14, %16 : vector<4x512xf32>
    %c0_6 = arith.constant 0 : index
    %c0_7 = arith.constant 0 : index
    %18 = vector.load %arg7[%c0_6, %c0_7] : memref<4x4xf32, #tpu.memory_space<vmem>>, vector<4x4xf32>
    %c0_8 = arith.constant 0 : index
    %c0_9 = arith.constant 0 : index
    %19 = vector.load %arg8[%c0_8, %c0_9] : memref<4x1xf32, #tpu.memory_space<vmem>>, vector<4x1xf32>
    %20 = vector.broadcast %19 : vector<4x1xf32> to vector<4x512xf32>
    %21 = arith.addf %17, %20 : vector<4x512xf32>
    %22 = vector.extract_strided_slice %18 {offsets = [0, 0], sizes = [4, 1], strides = [1, 1]} : vector<4x4xf32> to vector<4x1xf32>
    %23 = vector.extract_strided_slice %17 {offsets = [0, 0], sizes = [1, 512], strides = [1, 1]} : vector<4x512xf32> to vector<1x512xf32>
    %24 = vector.broadcast %22 : vector<4x1xf32> to vector<4x512xf32>
    %25 = vector.broadcast %23 : vector<1x512xf32> to vector<4x512xf32>
    %26 = arith.mulf %24, %25 : vector<4x512xf32>
    %27 = arith.addf %21, %26 : vector<4x512xf32>
    %28 = vector.extract_strided_slice %18 {offsets = [0, 1], sizes = [4, 1], strides = [1, 1]} : vector<4x4xf32> to vector<4x1xf32>
    %29 = vector.extract_strided_slice %17 {offsets = [1, 0], sizes = [1, 512], strides = [1, 1]} : vector<4x512xf32> to vector<1x512xf32>
    %30 = vector.broadcast %28 : vector<4x1xf32> to vector<4x512xf32>
    %31 = vector.broadcast %29 : vector<1x512xf32> to vector<4x512xf32>
    %32 = arith.mulf %30, %31 : vector<4x512xf32>
    %33 = arith.addf %27, %32 : vector<4x512xf32>
    %34 = vector.extract_strided_slice %18 {offsets = [0, 2], sizes = [4, 1], strides = [1, 1]} : vector<4x4xf32> to vector<4x1xf32>
    %35 = vector.extract_strided_slice %17 {offsets = [2, 0], sizes = [1, 512], strides = [1, 1]} : vector<4x512xf32> to vector<1x512xf32>
    %36 = vector.broadcast %34 : vector<4x1xf32> to vector<4x512xf32>
    %37 = vector.broadcast %35 : vector<1x512xf32> to vector<4x512xf32>
    %38 = arith.mulf %36, %37 : vector<4x512xf32>
    %39 = arith.addf %33, %38 : vector<4x512xf32>
    %40 = vector.extract_strided_slice %18 {offsets = [0, 3], sizes = [4, 1], strides = [1, 1]} : vector<4x4xf32> to vector<4x1xf32>
    %41 = vector.extract_strided_slice %17 {offsets = [3, 0], sizes = [1, 512], strides = [1, 1]} : vector<4x512xf32> to vector<1x512xf32>
    %42 = vector.broadcast %40 : vector<4x1xf32> to vector<4x512xf32>
    %43 = vector.broadcast %41 : vector<1x512xf32> to vector<4x512xf32>
    %44 = arith.mulf %42, %43 : vector<4x512xf32>
    %45 = arith.addf %39, %44 : vector<4x512xf32>
    %c0_10 = arith.constant 0 : index
    %c0_11 = arith.constant 0 : index
    %46 = vector.load %arg10[%c0_10, %c0_11] : memref<8x128xf32, #tpu.memory_space<vmem>>, vector<8x128xf32>
    %47 = arith.subf %12, %45 : vector<4x512xf32>
    %48 = math.absf %47 : vector<4x512xf32>
    %49 = vector.shape_cast %48 : vector<4x512xf32> to vector<1x4x512xf32>
    %cst = arith.constant dense<0.000000e+00> : vector<1xf32>
    %50 = vector.multi_reduction <add>, %49, %cst [1, 2] : vector<1x4x512xf32> to vector<1xf32>
    %51 = vector.shape_cast %50 : vector<1xf32> to vector<1x1x1xf32>
    %52 = vector.extract %51[0, 0, 0] : f32 from vector<1x1x1xf32>
    %53 = vector.broadcast %52 : f32 to vector<8x128xf32>
    %54 = arith.addf %46, %53 : vector<8x128xf32>
    %c0_12 = arith.constant 0 : index
    %c0_13 = arith.constant 0 : index
    %55 = vector.load %arg10[%c0_12, %c0_13] : memref<8x128xf32, #tpu.memory_space<vmem>>, vector<8x128xf32>
    tpu.vector_store %arg10[%c0_12, %c0_13], %54 {strides = array<i32>} : memref<8x128xf32, #tpu.memory_space<vmem>>, vector<8x128xf32>,
    %c0_i32_14 = arith.constant 0 : i32
    %56 = arith.cmpi eq, %arg1, %c0_i32_14 : i32
    %57 = arith.extui %56 : i1 to i32
    %c0_i32_15 = arith.constant 0 : i32
    %58 = arith.cmpi ne, %57, %c0_i32_15 : i32
    scf.if %58 {
      %c0_16 = arith.constant 0 : index
      %c0_17 = arith.constant 0 : index
      %59 = vector.load %arg10[%c0_16, %c0_17] : memref<8x128xf32, #tpu.memory_space<vmem>>, vector<8x128xf32>
      %60 = vector.shape_cast %59 : vector<8x128xf32> to vector<1x8x128xf32>
      %c0_18 = arith.constant 0 : index
      %c0_19 = arith.constant 0 : index
      %c0_20 = arith.constant 0 : index
      %61 = vector.load %arg9[%c0_18, %c0_19, %c0_20] : memref<1x8x128xf32, #tpu.memory_space<vmem>>, vector<1x8x128xf32>
      tpu.vector_store %arg9[%c0_18, %c0_19, %c0_20], %60 {strides = array<i32>} : memref<1x8x128xf32, #tpu.memory_space<vmem>>, vector<1x8x128xf32>,
    } else {
    }
    return
  }
  func.func @transform_0(%arg0: i32, %arg1: i32, %arg2: memref<2xi32, #tpu.memory_space<smem>>, %arg3: memref<1000xf32, #tpu.memory_space<smem>>, %arg4: memref<1000xf32, #tpu.memory_space<smem>>) -> (i32, i32, i32) {
    %c0_i32 = arith.constant 0 : i32
    %c0_i32_0 = arith.constant 0 : i32
    return %arg0, %c0_i32, %arg1 : i32, i32, i32
  }
  func.func @transform_1(%arg0: i32, %arg1: i32, %arg2: memref<2xi32, #tpu.memory_space<smem>>, %arg3: memref<1000xf32, #tpu.memory_space<smem>>, %arg4: memref<1000xf32, #tpu.memory_space<smem>>) -> (i32, i32, i32) {
    %c0_i32 = arith.constant 0 : i32
    %c0_i32_0 = arith.constant 0 : i32
    return %arg0, %c0_i32, %arg1 : i32, i32, i32
  }
  func.func @transform_2(%arg0: i32, %arg1: i32, %arg2: memref<2xi32, #tpu.memory_space<smem>>, %arg3: memref<1000xf32, #tpu.memory_space<smem>>, %arg4: memref<1000xf32, #tpu.memory_space<smem>>) -> (i32, i32) {
    %c0_i32 = arith.constant 0 : i32
    %c0_i32_0 = arith.constant 0 : i32
    %c0_i32_1 = arith.constant 0 : i32
    return %c0_i32, %c0_i32_0 : i32, i32
  }
  func.func @transform_3(%arg0: i32, %arg1: i32, %arg2: memref<2xi32, #tpu.memory_space<smem>>, %arg3: memref<1000xf32, #tpu.memory_space<smem>>, %arg4: memref<1000xf32, #tpu.memory_space<smem>>) -> (i32, i32) {
    %c0_i32 = arith.constant 0 : i32
    %c0_i32_0 = arith.constant 0 : i32
    %c0_i32_1 = arith.constant 0 : i32
    return %c0_i32, %c0_i32_0 : i32, i32
  }
  func.func @transform_4(%arg0: i32, %arg1: i32, %arg2: memref<2xi32, #tpu.memory_space<smem>>, %arg3: memref<1000xf32, #tpu.memory_space<smem>>, %arg4: memref<1000xf32, #tpu.memory_space<smem>>) -> (i32, i32, i32) {
    %c0_i32 = arith.constant 0 : i32
    %c0_i32_0 = arith.constant 0 : i32
    %c0_i32_1 = arith.constant 0 : i32
    return %arg0, %c0_i32, %c0_i32_0 : i32, i32, i32
  }
}

</mosaic_0001>

<llo_original>
// kernel: tpu_custom_call.1
$region0: #{tpu_custom_call.1}
  #allocation0 [shape = 'u32[]', space=smem, size = 0x4, offset = 0x4, fixed_abs, tag = 'smem constant byte address 0x4 - core index']
  #allocation1 [shape = 'u32[144,128]{1,0:T(1,128)}', space=vmem, size = 0x12000, scoped, tag = 'internal scratch']
  #allocation2 [shape = 'f32[8,128]{1,0:T(8,128)}', space=vmem, size = 0x1000, scoped, tag = 'scratch operand']
  #allocation3 [shape = 's32[1]{0}', space=sflag, size = 0x4, scoped, tag = 'scoped memory for tpu_custom_call.1']
  #allocation4 [shape = 'u8[512]{0}', space=smem, size = 0x200, scoped, tag = 'prefetched SMEM operand 0']
  #allocation5 [shape = 'u8[4096]{0}', space=smem, size = 0x1000, scoped, tag = 'prefetched SMEM operand 1']
  #allocation6 [shape = 'u8[4096]{0}', space=smem, size = 0x1000, scoped, tag = 'prefetched SMEM operand 2']
  %s0 = inlined_call_operand.hbm [shape: s32[2], index: 0, kind: input, shape index: {}]
  %s1 = inlined_call_operand.hbm [shape: f32[1000], index: 1, kind: input, shape index: {}]
  %s2 = inlined_call_operand.vmem [shape: f32[1000], index: 2, kind: input, shape index: {}]
  %s3 = inlined_call_operand.hbm [shape: f32[2,4,512], index: 3, kind: input, shape index: {}]
  %s4 = inlined_call_operand.hbm [shape: f32[2,4,512], index: 4, kind: input, shape index: {}]
  %s5 = inlined_call_operand.vmem [shape: f32[4,4], index: 5, kind: input, shape index: {}]
  %s6 = inlined_call_operand.vmem [shape: f32[4,1], index: 6, kind: input, shape index: {}]
  %s7 = inlined_call_operand.hbm [shape: f32[2,8,128], index: 7, kind: output, shape index: {}]
  %s8 = sld [smem:[#allocation0]]
  $region65: #{tpu_custom_call.1} parent=0
    _
  %s10 = ssub.s32 1, %s8
  %s11 = scalar_select 0, %s10, %s8
  %13 = dma.hbm_to_smem %s0, 16, [#allocation4], [#allocation3]
  %15 = dma.hbm_to_smem %s1, 128, [#allocation5], [#allocation3]
  %s16 = sshll.u32 %s2, 4
  %s17 = int_to_ptr.vmem [resolvable:$true] %s16
  %19 = dma.vmem_to_smem %s17, 128, [#allocation6], [#allocation3]
  %20 = dma.done [#allocation3], 272
  %21 = sfence
  $region1: #{tpu_custom_call.1} parent=0
    #allocation7 [shape = 'u8[16384]{0}', space=vmem, size = 0x4000, scoped, tag = 'input window, operand 3']
    #allocation8 [shape = 's32[2]{0}', space=sflag, size = 0x8, scoped, tag = 'scoped memory for tpu_custom_call.1']
    #allocation9 [shape = 's32[2]{0}', space=sflag, size = 0x8, scoped, tag = 'scoped memory for tpu_custom_call.1']
    #allocation10 [shape = 'u8[16384]{0}', space=vmem, size = 0x4000, scoped, tag = 'input window, operand 4']
    #allocation11 [shape = 's32[2]{0}', space=sflag, size = 0x8, scoped, tag = 'scoped memory for tpu_custom_call.1']
    #allocation12 [shape = 'u8[8192]{0}', space=vmem, size = 0x2000, scoped, tag = 'output window, operand 0']
    %22 = vsyncpa [#allocation8], 0
    %s23 = scalar_lea.sflag [#allocation8], 1
    %24 = vsyncpa %s23, 0
    %25 = vsyncpa [#allocation11], 0
    %s26 = scalar_lea.sflag [#allocation11], 1
    %27 = vsyncpa %s26, 0
    %28 = vsyncpa [#allocation9], 0
    %s29 = scalar_lea.sflag [#allocation9], 1
    %30 = vsyncpa %s29, 0
    loop: start=0, step=1, limit=4
    $region2: #{tpu_custom_call.1} parent=1 // loop_pre_header
      _
    $region3: #{tpu_custom_call.1} parent=1 // loop_header
      %s32 = sphi 0, %s36
      %p33 = scmp.ge.s32.totalorder %s32, 4
      %s39 = sphi 0, %s51
      %s40 = sphi 0, %s47
      %s41 = sphi 0, %s39
      %s42 = sphi 0, %s40
      %s43 = sphi 0, %s41
      %s44 = sphi 0, %s42
      %s56 = sphi 0, %s58
      %s59 = sphi 0, %s56
      %s60 = sphi 0, %s59
      %s76 = sphi 0, %s60
      %s84 = sphi 0, %s86
      %s87 = sphi 0, %s84
      %s88 = sphi 0, %s87
      %s104 = sphi 0, %s88
      %s108 = sphi 0, %s108
      %s110 = sphi 0, %s108
      %s111 = sphi 0, %s110
      %s125 = sphi 0, %s111
      %s129 = sphi 0, %s129
      %s131 = sphi 0, %s129
      %s132 = sphi 0, %s131
      %s146 = sphi 0, %s132
      %s152 = sphi 0, %s154
      %s155 = sphi 0, %s152
      %s156 = sphi 0, %s155
      %s172 = sphi 0, %s156
    $region4: #{tpu_custom_call.1} parent=1 // loop_header_branch
      %35 = sbr.rel (%p33) target = $region8
    $region5: #{tpu_custom_call.1} parent=1 // loop_body
      %s37 = ssub.s32 %s32, 1
      %s38 = ssub.s32 %s32, 2
      %s45 = sadd.s32 1, %s40
      %p46 = scmp.ge.s32.totalorder %s45, 1
      %s47 = scalar_select %p46, 0, %s45
      %s48 = sadd.s32 1, %s39
      %s49 = scalar_select %p46, %s48, %s39
      %p50 = scmp.ge.s32.totalorder %s49, 2
      %s51 = scalar_select %p50, 0, %s49
      %s52 = ssub.s32 %s39, %s51
      %s53 = ssub.s32 %s40, %s47
      %s54 = sor.u32 %s52, %s53
      %p55 = scmp.eq.s32.totalorder %s54, 0
      %s57 = sadd.s32 %s56, 1
      %s58 = scalar_select %p55, %s56, %s57
      %p61 = pneg %p55
      %p62 = scmp.eq.s32.totalorder %s32, 1
      %p63 = por %p61, %p62
      %p64 = scmp.ne.s32.totalorder %s56, %s59
      %p65 = scmp.eq.s32.totalorder %s32, 0
      %p66 = por %p64, %p65
      %p67 = scmp.ne.s32.totalorder %s56, %s59
      %p68 = scmp.eq.s32.totalorder %s37, 1
      %p69 = por %p67, %p68
      %p70 = scmp.ne.s32.totalorder %s59, %s60
      %p71 = scmp.eq.s32.totalorder %s37, 0
      %p72 = por %p70, %p71
      %p73 = scmp.ne.s32.totalorder %s59, %s60
      %p74 = scmp.eq.s32.totalorder %s38, 1
      %p75 = por %p73, %p74
      %p77 = scmp.ne.s32.totalorder %s60, %s76
      %p78 = scmp.eq.s32.totalorder %s38, 0
      %p79 = por %p77, %p78
      %s80 = ssub.s32 %s39, %s51
      %s81 = ssub.s32 %s40, %s47
      %s82 = sor.u32 %s80, %s81
      %p83 = scmp.eq.s32.totalorder %s82, 0
      %s85 = sadd.s32 %s84, 1
      %s86 = scalar_select %p83, %s84, %s85
      %p89 = pneg %p83
      %p90 = scmp.eq.s32.totalorder %s32, 1
      %p91 = por %p89, %p90
      %p92 = scmp.ne.s32.totalorder %s84, %s87
      %p93 = scmp.eq.s32.totalorder %s32, 0
      %p94 = por %p92, %p93
      %p95 = scmp.ne.s32.totalorder %s84, %s87
      %p96 = scmp.eq.s32.totalorder %s37, 1
      %p97 = por %p95, %p96
      %p98 = scmp.ne.s32.totalorder %s87, %s88
      %p99 = scmp.eq.s32.totalorder %s37, 0
      %p100 = por %p98, %p99
      %p101 = scmp.ne.s32.totalorder %s87, %s88
      %p102 = scmp.eq.s32.totalorder %s38, 1
      %p103 = por %p101, %p102
      %p105 = scmp.ne.s32.totalorder %s88, %s104
      %p106 = scmp.eq.s32.totalorder %s38, 0
      %p107 = por %p105, %p106
      %s109 = sadd.s32 %s108, 1
      %p112 = scmp.eq.s32.totalorder %s32, 1
      %p113 = scmp.ne.s32.totalorder %s108, %s110
      %p114 = scmp.eq.s32.totalorder %s32, 0
      %p115 = por %p113, %p114
      %p116 = scmp.ne.s32.totalorder %s108, %s110
      %p117 = scmp.eq.s32.totalorder %s37, 1
      %p118 = por %p116, %p117
      %p119 = scmp.ne.s32.totalorder %s110, %s111
      %p120 = scmp.eq.s32.totalorder %s37, 0
      %p121 = por %p119, %p120
      %p122 = scmp.ne.s32.totalorder %s110, %s111
      %p123 = scmp.eq.s32.totalorder %s38, 1
      %p124 = por %p122, %p123
      %p126 = scmp.ne.s32.totalorder %s111, %s125
      %p127 = scmp.eq.s32.totalorder %s38, 0
      %p128 = por %p126, %p127
      %s130 = sadd.s32 %s129, 1
      %p133 = scmp.eq.s32.totalorder %s32, 1
      %p134 = scmp.ne.s32.totalorder %s129, %s131
      %p135 = scmp.eq.s32.totalorder %s32, 0
      %p136 = por %p134, %p135
      %p137 = scmp.ne.s32.totalorder %s129, %s131
      %p138 = scmp.eq.s32.totalorder %s37, 1
      %p139 = por %p137, %p138
      %p140 = scmp.ne.s32.totalorder %s131, %s132
      %p141 = scmp.eq.s32.totalorder %s37, 0
      %p142 = por %p140, %p141
      %p143 = scmp.ne.s32.totalorder %s131, %s132
      %p144 = scmp.eq.s32.totalorder %s38, 1
      %p145 = por %p143, %p144
      %p147 = scmp.ne.s32.totalorder %s132, %s146
      %p148 = scmp.eq.s32.totalorder %s38, 0
      %p149 = por %p147, %p148
      %s150 = ssub.s32 %s39, %s51
      %p151 = scmp.eq.s32.totalorder %s150, 0
      %s153 = sadd.s32 %s152, 1
      %s154 = scalar_select %p151, %s152, %s153
      %p157 = pneg %p151
      %p158 = scmp.eq.s32.totalorder %s32, 1
      %p159 = por %p157, %p158
      %p160 = scmp.ne.s32.totalorder %s152, %s155
      %p161 = scmp.eq.s32.totalorder %s32, 0
      %p162 = por %p160, %p161
      %p163 = scmp.ne.s32.totalorder %s152, %s155
      %p164 = scmp.eq.s32.totalorder %s37, 1
      %p165 = por %p163, %p164
      %p166 = scmp.ne.s32.totalorder %s155, %s156
      %p167 = scmp.eq.s32.totalorder %s37, 0
      %p168 = por %p166, %p167
      %p169 = scmp.ne.s32.totalorder %s155, %s156
      %p170 = scmp.eq.s32.totalorder %s38, 1
      %p171 = por %p169, %p170
      %p173 = scmp.ne.s32.totalorder %s156, %s172
      %p174 = scmp.eq.s32.totalorder %s38, 0
      %p175 = por %p173, %p174
      %p176 = scmp.le.s32.totalorder 1, %s32
      %p177 = scmp.lt.s32.totalorder %s32, 3
      %p178 = pnand %p176, %p177
      %p179 = pneg %p178
      // Predicated region
      $region9: #{tpu_custom_call.1} parent=5 // pred_check
        _
      $region10: #{tpu_custom_call.1} parent=5 // pred_check_branch
        %181 = sbr.rel (%p178) target = $region12
      $region11: #{tpu_custom_call.1} parent=5 // pred_region
        %s182 = ssub.s32 %s32, 1
        // Predicated region
        $region13: #{tpu_custom_call.1} parent=11 // pred_check
          %p183 = pneg %p121
        $region14: #{tpu_custom_call.1} parent=11 // pred_check_branch
          %185 = sbr.rel (%p183) target = $region16
        $region15: #{tpu_custom_call.1} parent=11 // pred_region
          _
        $region16: #{tpu_custom_call.1} parent=11 // pred_fallthru
          _
        // Predicated region
        $region17: #{tpu_custom_call.1} parent=11 // pred_check
          %p186 = pneg %p142
        $region18: #{tpu_custom_call.1} parent=11 // pred_check_branch
          %188 = sbr.rel (%p186) target = $region20
        $region19: #{tpu_custom_call.1} parent=11 // pred_region
          _
        $region20: #{tpu_custom_call.1} parent=11 // pred_fallthru
          _
      $region12: #{tpu_custom_call.1} parent=5 // pred_fallthru
        _
      %p189 = scmp.lt.s32.totalorder %s32, 2
      // Predicated region
      $region21: #{tpu_custom_call.1} parent=5 // pred_check
        %p190 = pneg %p189
      $region22: #{tpu_custom_call.1} parent=5 // pred_check_branch
        %192 = sbr.rel (%p190) target = $region24
      $region23: #{tpu_custom_call.1} parent=5 // pred_region
        // Predicated region
        $region25: #{tpu_custom_call.1} parent=23 // pred_check
          %p193 = pneg %p66
        $region26: #{tpu_custom_call.1} parent=23 // pred_check_branch
          %195 = sbr.rel (%p193) target = $region28
        $region27: #{tpu_custom_call.1} parent=23 // pred_region
          %s196 = sand.u32 %s56, 1
          %s197 = scalar_lea.sflag [#allocation8], %s196
          %s198 = sand.u32 %s56, 1
          %s199 = smul.addr %s198, 16
          %s200 = scalar_lea.vmem [#allocation7], %s199
          %s201 = smul.u32 4, %s40
          %s203 = ssub.s32 256, 256
          %204 = vsyncadd %s197, %s203
          %s205 = smul.addr %s39, 4
          %s206 = sadd.s32 %s201, %s205
          %s207 = smul.addr %s206, 64
          %s208 = scalar_lea.hbm %s3, %s207
          %s210 = sshll.u32 %s200, 4
          %s211 = int_to_ptr.vmem [resolvable:$true] %s210
          %213 = dma.hbm_to_vmem [thread:$0]  %s208, 256, %s211, %s197
        $region28: #{tpu_custom_call.1} parent=23 // pred_fallthru
          _
        // Predicated region
        $region29: #{tpu_custom_call.1} parent=23 // pred_check
          %p214 = pneg %p94
        $region30: #{tpu_custom_call.1} parent=23 // pred_check_branch
          %216 = sbr.rel (%p214) target = $region32
        $region31: #{tpu_custom_call.1} parent=23 // pred_region
          %s217 = sand.u32 %s84, 1
          %s218 = scalar_lea.sflag [#allocation11], %s217
          %s219 = sand.u32 %s84, 1
          %s220 = smul.addr %s219, 16
          %s221 = scalar_lea.vmem [#allocation10], %s220
          %s222 = smul.u32 4, %s40
          %s224 = ssub.s32 256, 256
          %225 = vsyncadd %s218, %s224
          %s226 = smul.addr %s39, 4
          %s227 = sadd.s32 %s222, %s226
          %s228 = smul.addr %s227, 64
          %s229 = scalar_lea.hbm %s4, %s228
          %s231 = sshll.u32 %s221, 4
          %s232 = int_to_ptr.vmem [resolvable:$true] %s231
          %234 = dma.hbm_to_vmem [thread:$0]  %s229, 256, %s232, %s218
        $region32: #{tpu_custom_call.1} parent=23 // pred_fallthru
          _
      $region24: #{tpu_custom_call.1} parent=5 // pred_fallthru
        _
      %p235 = scmp.le.s32.totalorder 1, %s32
      %p236 = scmp.lt.s32.totalorder %s32, 3
      %p237 = pnand %p235, %p236
      %p238 = pneg %p237
      // Predicated region
      $region33: #{tpu_custom_call.1} parent=5 // pred_check
        _
      $region34: #{tpu_custom_call.1} parent=5 // pred_check_branch
        %240 = sbr.rel (%p237) target = $region36
      $region35: #{tpu_custom_call.1} parent=5 // pred_region
        %s241 = ssub.s32 %s32, 1
        %s242 = sand.u32 %s59, 1
        %s243 = scalar_lea.sflag [#allocation8], %s242
        %s244 = sand.u32 %s59, 1
        %s245 = smul.addr %s244, 16
        %s246 = scalar_lea.vmem [#allocation7], %s245
        // Predicated region
        $region37: #{tpu_custom_call.1} parent=35 // pred_check
          %p247 = pneg %p72
        $region38: #{tpu_custom_call.1} parent=35 // pred_check_branch
          %249 = sbr.rel (%p247) target = $region40
        $region39: #{tpu_custom_call.1} parent=35 // pred_region
          %250 = dma.done %s243, 256
        $region40: #{tpu_custom_call.1} parent=35 // pred_fallthru
          _
        %s251 = sand.u32 %s87, 1
        %s252 = scalar_lea.sflag [#allocation11], %s251
        %s253 = sand.u32 %s87, 1
        %s254 = smul.addr %s253, 16
        %s255 = scalar_lea.vmem [#allocation10], %s254
        // Predicated region
        $region41: #{tpu_custom_call.1} parent=35 // pred_check
          %p256 = pneg %p100
        $region42: #{tpu_custom_call.1} parent=35 // pred_check_branch
          %258 = sbr.rel (%p256) target = $region44
        $region43: #{tpu_custom_call.1} parent=35 // pred_region
          %259 = dma.done %s252, 256
        $region44: #{tpu_custom_call.1} parent=35 // pred_fallthru
          _
        %s260 = sand.u32 %s59, 1
        %s261 = scalar_lea.sflag [#allocation8], %s260
        %s262 = sand.u32 %s59, 1
        %s263 = smul.addr %s262, 16
        %s264 = scalar_lea.vmem [#allocation7], %s263
        %p265 = pneg %p72
        %p266 = pneg %p69
        %s267 = sand.u32 %s87, 1
        %s268 = scalar_lea.sflag [#allocation11], %s267
        %s269 = sand.u32 %s87, 1
        %s270 = smul.addr %s269, 16
        %s271 = scalar_lea.vmem [#allocation10], %s270
        %p272 = pneg %p100
        %p273 = pneg %p97
        %p274 = pneg %p121
        %p275 = pneg %p118
        %p276 = pneg %p142
        %p277 = pneg %p139
        %p278 = pneg %p168
        %p279 = pneg %p165
        %s280 = sand.u32 %s155, 1
        %s281 = scalar_lea.sflag [#allocation9], %s280
        %s282 = sand.u32 %s155, 1
        %s283 = smul.addr %s282, 8
        %s284 = scalar_lea.vmem [#allocation12], %s283
        %s285 = smul.u32 4, %s42
        %s286 = smul.u32 4, %s42
        %p287 = scmp.eq.s32.totalorder %s42, 0
        // Predicated region
        $region45: #{tpu_custom_call.1} parent=35 // pred_check
          %p288 = pneg %p287
        $region46: #{tpu_custom_call.1} parent=35 // pred_check_branch
          %290 = sbr.rel (%p288) target = $region48
        $region47: #{tpu_custom_call.1} parent=35 // pred_region
          %291 = vst [vmem:[#allocation2] sm:$0xff] 0.0
        $region48: #{tpu_custom_call.1} parent=35 // pred_fallthru
          _
        %s292 = sld [smem:[#allocation4 + %s41]]
        %s293 = sld [smem:[#allocation5 + %s292]]
        %s294 = sld [smem:[#allocation6 + %s292]]
        %v295 = vld [vmem:[%s246] sm:$0xff]
        %v296 = vld [vmem:[%s246 + $0x8] sm:$0xff]
        %v297 = vld [vmem:[%s255] sm:$0xff]
        %v298 = vld [vmem:[%s255 + $0x8] sm:$0xff]
        %v299 = vstv %s293
        %v300 = vmul.f32 %v299, %v295
        %v301 = vmul.f32 %v299, %v296
        %v302 = vstv %s294
        %v303 = vmul.f32 %v302, %v297
        %v304 = vmul.f32 %v302, %v298
        %v305 = vadd.f32 %v300, %v303
        %v306 = vadd.f32 %v301, %v304
        %v307 = vld [vmem:[%s5] sm:$0xf]
        %v308 = vld [vmem:[%s6] sm:$0xf]
        %310 = vset.pattern.permute.xlu0 0
        %311 = vperm.xlu0 %310, %v308
        %v312 = vpop.permute.xlu0 %311
        %v314 = vunpack.c.l.s4 839922192
        %v315 = vunpack.c.0.s8 %v314
        %v316 = vlaneseq
        %v317 = vshrl.u32 %v316, 7
        %v318 = vsub.s32 %v315, %v317
        %v319 = vrot.slane %v312, %v318
        %v321 = vadd.f32 %v305, %v319
        %v322 = vadd.f32 %v306, %v319
        %324 = vset.pattern.permute.xlu0 0
        %325 = vperm.xlu0 %324, %v307
        %v326 = vpop.permute.xlu0 %325
        %v330 = vlaneseq
        %v331 = vshrl.u32 %v330, 7
        %v332 = vsub.s32 0, %v331
        %v333 = vrot.slane %v305, %v332
        %v334 = vlaneseq
        %v335 = vshrl.u32 %v334, 7
        %v336 = vsub.s32 4, %v335
        %v337 = vrot.slane %v305, %v336
        %v338 = vlaneseq
        %v339 = vshrl.u32 %v338, 7
        %v340 = vsub.s32 0, %v339
        %v341 = vrot.slane %v306, %v340
        %v342 = vlaneseq
        %v343 = vshrl.u32 %v342, 7
        %v344 = vsub.s32 4, %v343
        %v345 = vrot.slane %v306, %v344
        %v350 = vlaneseq
        %v351 = vshrl.u32 %v350, 7
        %v352 = vsub.s32 0, %v351
        %v353 = vrot.slane %v333, %v352
        %v354 = vlaneseq
        %v355 = vshrl.u32 %v354, 7
        %v356 = vsub.s32 0, %v355
        %v357 = vrot.slane %v337, %v356
        %v358 = vlaneseq
        %v359 = vshrl.u32 %v358, 7
        %v360 = vsub.s32 0, %v359
        %v361 = vrot.slane %v341, %v360
        %v362 = vlaneseq
        %v363 = vshrl.u32 %v362, 7
        %v364 = vsub.s32 0, %v363
        %v365 = vrot.slane %v345, %v364
        %v366 = vmul.f32 %v326, %v353
        %v367 = vmul.f32 %v326, %v357
        %v368 = vmul.f32 %v326, %v361
        %v369 = vmul.f32 %v326, %v365
        %v374 = vcombine.low %v366, %v367
        %v375 = vcombine.low %v368, %v369
        %v378 = vadd.f32 %v321, %v374
        %v379 = vadd.f32 %v322, %v375
        %380 = vset.pattern.permute.xlu0 1
        %381 = vperm.xlu0 %380, %v307
        %v382 = vpop.permute.xlu0 %381
        %v384 = vlaneseq
        %v385 = vshrl.u32 %v384, 7
        %v386 = vsub.s32 1, %v385
        %v387 = vrot.slane %v305, %v386
        %v388 = vlaneseq
        %v389 = vshrl.u32 %v388, 7
        %v390 = vsub.s32 5, %v389
        %v391 = vrot.slane %v305, %v390
        %v392 = vlaneseq
        %v393 = vshrl.u32 %v392, 7
        %v394 = vsub.s32 1, %v393
        %v395 = vrot.slane %v306, %v394
        %v396 = vlaneseq
        %v397 = vshrl.u32 %v396, 7
        %v398 = vsub.s32 5, %v397
        %v399 = vrot.slane %v306, %v398
        %v404 = vlaneseq
        %v405 = vshrl.u32 %v404, 7
        %v406 = vsub.s32 1, %v405
        %v407 = vrot.slane %v387, %v406
        %v408 = vlaneseq
        %v409 = vshrl.u32 %v408, 7
        %v410 = vsub.s32 1, %v409
        %v411 = vrot.slane %v391, %v410
        %v412 = vlaneseq
        %v413 = vshrl.u32 %v412, 7
        %v414 = vsub.s32 1, %v413
        %v415 = vrot.slane %v395, %v414
        %v416 = vlaneseq
        %v417 = vshrl.u32 %v416, 7
        %v418 = vsub.s32 1, %v417
        %v419 = vrot.slane %v399, %v418
        %v420 = vmul.f32 %v382, %v407
        %v421 = vmul.f32 %v382, %v411
        %v422 = vmul.f32 %v382, %v415
        %v423 = vmul.f32 %v382, %v419
        %v428 = vcombine.low %v420, %v421
        %v429 = vcombine.low %v422, %v423
        %v432 = vadd.f32 %v378, %v428
        %v433 = vadd.f32 %v379, %v429
        %434 = vset.pattern.permute.xlu0 2
        %435 = vperm.xlu0 %434, %v307
        %v436 = vpop.permute.xlu0 %435
        %v438 = vlaneseq
        %v439 = vshrl.u32 %v438, 7
        %v440 = vsub.s32 2, %v439
        %v441 = vrot.slane %v305, %v440
        %v442 = vlaneseq
        %v443 = vshrl.u32 %v442, 7
        %v444 = vsub.s32 6, %v443
        %v445 = vrot.slane %v305, %v444
        %v446 = vlaneseq
        %v447 = vshrl.u32 %v446, 7
        %v448 = vsub.s32 2, %v447
        %v449 = vrot.slane %v306, %v448
        %v450 = vlaneseq
        %v451 = vshrl.u32 %v450, 7
        %v452 = vsub.s32 6, %v451
        %v453 = vrot.slane %v306, %v452
        %v458 = vlaneseq
        %v459 = vshrl.u32 %v458, 7
        %v460 = vsub.s32 2, %v459
        %v461 = vrot.slane %v441, %v460
        %v462 = vlaneseq
        %v463 = vshrl.u32 %v462, 7
        %v464 = vsub.s32 2, %v463
        %v465 = vrot.slane %v445, %v464
        %v466 = vlaneseq
        %v467 = vshrl.u32 %v466, 7
        %v468 = vsub.s32 2, %v467
        %v469 = vrot.slane %v449, %v468
        %v470 = vlaneseq
        %v471 = vshrl.u32 %v470, 7
        %v472 = vsub.s32 2, %v471
        %v473 = vrot.slane %v453, %v472
        %v474 = vmul.f32 %v436, %v461
        %v475 = vmul.f32 %v436, %v465
        %v476 = vmul.f32 %v436, %v469
        %v477 = vmul.f32 %v436, %v473
        %v482 = vcombine.low %v474, %v475
        %v483 = vcombine.low %v476, %v477
        %v486 = vadd.f32 %v432, %v482
        %v487 = vadd.f32 %v433, %v483
        %488 = vset.pattern.permute.xlu0 3
        %489 = vperm.xlu0 %488, %v307
        %v490 = vpop.permute.xlu0 %489
        %v492 = vlaneseq
        %v493 = vshrl.u32 %v492, 7
        %v494 = vsub.s32 3, %v493
        %v495 = vrot.slane %v305, %v494
        %v496 = vlaneseq
        %v497 = vshrl.u32 %v496, 7
        %v498 = vsub.s32 7, %v497
        %v499 = vrot.slane %v305, %v498
        %v500 = vlaneseq
        %v501 = vshrl.u32 %v500, 7
        %v502 = vsub.s32 3, %v501
        %v503 = vrot.slane %v306, %v502
        %v504 = vlaneseq
        %v505 = vshrl.u32 %v504, 7
        %v506 = vsub.s32 7, %v505
        %v507 = vrot.slane %v306, %v506
        %v512 = vlaneseq
        %v513 = vshrl.u32 %v512, 7
        %v514 = vsub.s32 3, %v513
        %v515 = vrot.slane %v495, %v514
        %v516 = vlaneseq
        %v517 = vshrl.u32 %v516, 7
        %v518 = vsub.s32 3, %v517
        %v519 = vrot.slane %v499, %v518
        %v520 = vlaneseq
        %v521 = vshrl.u32 %v520, 7
        %v522 = vsub.s32 3, %v521
        %v523 = vrot.slane %v503, %v522
        %v524 = vlaneseq
        %v525 = vshrl.u32 %v524, 7
        %v526 = vsub.s32 3, %v525
        %v527 = vrot.slane %v507, %v526
        %v528 = vmul.f32 %v490, %v515
        %v529 = vmul.f32 %v490, %v519
        %v530 = vmul.f32 %v490, %v523
        %v531 = vmul.f32 %v490, %v527
        %v536 = vcombine.low %v528, %v529
        %v537 = vcombine.low %v530, %v531
        %v540 = vadd.f32 %v486, %v536
        %v541 = vadd.f32 %v487, %v537
        %v542 = vld [vmem:[#allocation2] sm:$0xff]
        %v543 = vsub.f32 %v297, %v540
        %v544 = vsub.f32 %v298, %v541
        %v545 = vand.u32 2147483647, %v543
        %v546 = vand.u32 2147483647, %v544
        %v549 = vcombine.high %v545, %v545
        %v550 = vcombine.high %v546, %v546
        %vm553 = vcmask 1043456
        %v554 = vsel %vm553, %v545, 0.0
        %v555 = vsel %vm553, %v549, 0.0
        %v556 = vadd.f32 %v554, %v555
        %v557 = vsel %vm553, %v546, 0.0
        %v558 = vadd.f32 %v556, %v557
        %v559 = vsel %vm553, %v550, 0.0
        %v560 = vadd.f32 %v558, %v559
        %561 = vadd.xlane.f32.xlu0 %v560
        %v562 = vpop.xlane.xlu0 %561
        %v563 = vrot.slane %v562, 4
        %v564 = vadd.f32 %v562, %v563
        %v565 = vrot.slane %v564, 2
        %v566 = vadd.f32 %v564, %v565
        %v567 = vrot.slane %v566, 1
        %v568 = vadd.f32 %v566, %v567
        %s569 = vtos %v568
        %v570 = vstv %s569
        %v571 = vadd.f32 %v542, %v570
        %572 = vst [vmem:[#allocation2] sm:$0xff] %v571
        // Predicated region
        $region49: #{tpu_custom_call.1} parent=35 // pred_check
          %p573 = pneg %p287
        $region50: #{tpu_custom_call.1} parent=35 // pred_check_branch
          %575 = sbr.rel (%p573) target = $region52
        $region51: #{tpu_custom_call.1} parent=35 // pred_region
          %v576 = vld [vmem:[#allocation2] sm:$0xff]
          %577 = vst [vmem:[%s284] sm:$0xff] %v576
        $region52: #{tpu_custom_call.1} parent=35 // pred_fallthru
          _
        %s578 = sand.u32 %s155, 1
        %s579 = scalar_lea.sflag [#allocation9], %s578
        %s580 = sand.u32 %s155, 1
        %s581 = smul.addr %s580, 8
        %s582 = scalar_lea.vmem [#allocation12], %s581
        // Predicated region
        $region53: #{tpu_custom_call.1} parent=35 // pred_check
          %p583 = pneg %p165
        $region54: #{tpu_custom_call.1} parent=35 // pred_check_branch
          %585 = sbr.rel (%p583) target = $region56
        $region55: #{tpu_custom_call.1} parent=35 // pred_region
          %s587 = ssub.s32 128, 128
          %588 = vsyncadd %s579, %s587
          %s589 = smul.addr %s41, 128
          %s590 = scalar_lea.hbm %s7, %s589
          %s592 = sshll.u32 %s582, 4
          %s593 = int_to_ptr.vmem [resolvable:$true] %s592
          %595 = dma.vmem_to_hbm [thread:$0]  %s593, 128, %s590, %s579
        $region56: #{tpu_custom_call.1} parent=35 // pred_fallthru
          _
      $region36: #{tpu_custom_call.1} parent=5 // pred_fallthru
        _
      %p596 = scmp.le.s32.totalorder 2, %s32
      // Predicated region
      $region57: #{tpu_custom_call.1} parent=5 // pred_check
        %p597 = pneg %p596
      $region58: #{tpu_custom_call.1} parent=5 // pred_check_branch
        %599 = sbr.rel (%p597) target = $region60
      $region59: #{tpu_custom_call.1} parent=5 // pred_region
        %s600 = ssub.s32 %s32, 2
        // Predicated region
        $region61: #{tpu_custom_call.1} parent=59 // pred_check
          %p601 = pneg %p171
        $region62: #{tpu_custom_call.1} parent=59 // pred_check_branch
          %603 = sbr.rel (%p601) target = $region64
        $region63: #{tpu_custom_call.1} parent=59 // pred_region
          %s604 = sand.u32 %s156, 1
          %s605 = scalar_lea.sflag [#allocation9], %s604
          %s606 = sand.u32 %s156, 1
          %s607 = smul.addr %s606, 8
          %s608 = scalar_lea.vmem [#allocation12], %s607
          %609 = dma.done %s605, 128
        $region64: #{tpu_custom_call.1} parent=59 // pred_fallthru
          _
      $region60: #{tpu_custom_call.1} parent=5 // pred_fallthru
        _
    $region6: #{tpu_custom_call.1} parent=1 // loop_footer
      %s36 = sadd.s32 1, %s32
    $region7: #{tpu_custom_call.1} parent=1 // loop_footer_branch
      %31 = sbr.rel target = $region3
    $region8: #{tpu_custom_call.1} parent=1 // loop_exit
      _
    %610 = vsyncpa [#allocation8], 1
    %s611 = scalar_lea.sflag [#allocation8], 1
    %612 = vsyncpa %s611, 1
    %613 = vsyncpa [#allocation11], 1
    %s614 = scalar_lea.sflag [#allocation11], 1
    %615 = vsyncpa %s614, 1
    %616 = vsyncpa [#allocation9], 1
    %s617 = scalar_lea.sflag [#allocation9], 1
    %618 = vsyncpa %s617, 1

</llo_original>
